<compile_context>
chip_gen: v7x
topology: tpu7x:2x2x1
jax: 0.10.0
libtpu: 0.0.40
codegen_flags: <defaults>
</compile_context>

<pallas_src>
import jax
import jax.numpy as jnp
from jax.experimental import pallas as pl
from jax.experimental.pallas import tpu as pltpu


# ----------------------------------------------------------------------------
# Primary path: the fastest "kernel" is no kernel.
# ----------------------------------------------------------------------------
def residual(hidden_states: jax.Array, input_tensor: jax.Array) -> jax.Array:
    """Residual.forward(hidden_states, input_tensor) -> input_tensor.

    hidden_states is dead in the pruned module; no HBM bandwidth or kernel
    dispatch is spent on it.  Returning input_tensor lets XLA elide the op.
    """
    del hidden_states
    return input_tensor


# ----------------------------------------------------------------------------
# Optional Pallas path: materialized, HBM-roofline-tiled, lane-dense copy.
# Use only when an explicit custom-call boundary / fresh output buffer is
# required; otherwise residual() above is strictly faster.
# ----------------------------------------------------------------------------
_MIN_BLOCK_BYTES = 1 << 20      # ~1 MiB floor: below this the copy falls off
                                # the HBM roofline on v5e/v6e (single TC).
_TARGET_BLOCK_BYTES = 3 << 20   # 2 streams x 2 double-buffers x 3 MiB = 12 MiB,
                                # under the 16 MiB v5e scoped-VMEM default.
_LANE_DENSE_CANDIDATES = (32768, 16384, 8192, 4096, 2048, 1024, 512, 256, 128)


def _copy_kernel(in_ref, out_ref):
    out_ref[...] = in_ref[...]


def _flatten_lane_dense(x: jax.Array):
    """Reshape the contiguous buffer to (rows, L) with L a multiple of 128."""
    n = x.size
    for lanes in _LANE_DENSE_CANDIDATES:
        if n % lanes == 0:
            return x.reshape(n // lanes, lanes)
    # No multiple-of-128 divisor: fall back to (rows, H).  Stores become
    # masked vst.msk if H < 128; acceptable for odd shapes, bit-exact either way.
    h = x.shape[-1] if x.ndim > 0 else 1
    return x.reshape(n // h, h)


def _pick_row_tile(rows: int, row_bytes: int) -> int:
    """Rows per block: multiple of 8, ~3 MiB, even grid when it is cheap."""
    if rows <= 8:
        return rows  # full first dim -> (8,128) divisibility constraint waived

    by_bytes = max(8, (_TARGET_BLOCK_BYTES // max(row_bytes, 1)) // 8 * 8)
    tr = max(8, min((rows // 8) * 8, by_bytes))

    steps = pl.cdiv(rows, tr)
    if steps % 2 == 1:
        # Prefer an even number of "parallel" grid steps so v7x's two
        # TensorCores stay balanced -- but never shrink a block below the
        # ~1 MiB floor (v5e/v6e get nothing from extra steps).
        t_cand = ((pl.cdiv(rows, steps + 1) + 7) // 8) * 8
        if (
            8 <= t_cand < rows
            and pl.cdiv(rows, t_cand) % 2 == 0
            and t_cand * row_bytes >= _MIN_BLOCK_BYTES
        ):
            return t_cand
    return tr


def residual_pallas(hidden_states: jax.Array, input_tensor: jax.Array) -> jax.Array:
    """Pallas materialized identity: fresh buffer, lane-dense tiled memcpy."""
    del hidden_states  # dead in the pruned module; never DMA'd

    orig_shape = input_tensor.shape
    x2 = _flatten_lane_dense(input_tensor)
    rows, lanes = x2.shape
    row_bytes = lanes * jnp.dtype(x2.dtype).itemsize
    tr = _pick_row_tile(rows, row_bytes)
    grid = (pl.cdiv(rows, tr),)
    spec = pl.BlockSpec((tr, lanes), lambda i: (i, 0))

    out = pl.pallas_call(
        _copy_kernel,
        out_shape=jax.ShapeDtypeStruct((rows, lanes), x2.dtype),
        grid_spec=pltpu.PrefetchScalarGridSpec(
            num_scalar_prefetch=0,
            grid=grid,
            in_specs=[spec],
            out_specs=spec,
        ),
        compiler_params=pltpu.CompilerParams(
            dimension_semantics=("parallel",),
        ),
    )(x2)
    return out.reshape(orig_shape)


if __name__ == "__main__":
    key = jax.random.PRNGKey(0)
    k1, k2, k3 = jax.random.split(key, 3)

    batch, seq, hidden = 2, 8, 32
    hidden_states = jax.random.normal(k1, (batch, seq, hidden), dtype=jnp.float32)
    input_tensor = jax.random.normal(k2, (batch, seq, hidden), dtype=jnp.float32)

    # Primary path: pure identity, no kernel (XLA elides it).
    out = jax.block_until_ready(residual(hidden_states, input_tensor))
    assert out.shape == input_tensor.shape
    assert out.dtype == input_tensor.dtype
    assert bool(jnp.array_equal(out, input_tensor))

    # Explicit Pallas path: (2,8,32) flattens lane-dense to (1, 512).
    out2 = jax.block_until_ready(residual_pallas(hidden_states, input_tensor))
    assert out2.shape == input_tensor.shape
    assert out2.dtype == input_tensor.dtype
    assert bool(jnp.array_equal(out2, input_tensor))

    # Multi-step grid with a partial trailing block: (13,8,128) -> (13, 1024),
    # tile 8 rows -> 2 grid steps, last block clipped to 5 rows.
    x3 = jax.random.normal(k3, (13, 8, 128), dtype=jnp.float32)
    out3 = jax.block_until_ready(residual_pallas(x3, x3))
    assert bool(jnp.array_equal(out3, x3))

    print("KERNEL_OK")
</pallas_src>

<mosaic_0001>
module attributes {stable_mosaic.version = 11 : i64} {
  func.func @_copy_kernel(%arg0: i32, %arg1: memref<1x512xf32, #tpu.memory_space<vmem>>, %arg2: memref<1x512xf32, #tpu.memory_space<vmem>>) attributes {dimension_semantics = [#tpu.dimension_semantics<parallel>], iteration_bounds = array<i64: 1>, scalar_prefetch = 0 : i64, scratch_operands = 0 : i64, tpu.core_type = #tpu.core_type<tc>, window_params = [{transform_indices = @transform_0, window_bounds = array<i64: 1, 512>}, {transform_indices = @transform_1, window_bounds = array<i64: 1, 512>}]} {
    %c0 = arith.constant 0 : index
    %c0_0 = arith.constant 0 : index
    %0 = vector.load %arg1[%c0, %c0_0] : memref<1x512xf32, #tpu.memory_space<vmem>>, vector<1x512xf32>
    %c0_1 = arith.constant 0 : index
    %c0_2 = arith.constant 0 : index
    %1 = vector.load %arg2[%c0_1, %c0_2] : memref<1x512xf32, #tpu.memory_space<vmem>>, vector<1x512xf32>
    tpu.vector_store %arg2[%c0_1, %c0_2], %0 {strides = array<i32>} : memref<1x512xf32, #tpu.memory_space<vmem>>, vector<1x512xf32>,
    return
  }
  func.func @transform_0(%arg0: i32) -> (i32, i32) {
    %c0_i32 = arith.constant 0 : i32
    %c0_i32_0 = arith.constant 0 : i32
    return %arg0, %c0_i32 : i32, i32
  }
  func.func @transform_1(%arg0: i32) -> (i32, i32) {
    %c0_i32 = arith.constant 0 : i32
    %c0_i32_0 = arith.constant 0 : i32
    return %arg0, %c0_i32 : i32, i32
  }
}

</mosaic_0001>

<llo_original>
// kernel: tpu_custom_call.1
$region0: #{tpu_custom_call.1}
  #allocation0 [shape = 'u32[]', space=smem, size = 0x4, offset = 0x4, fixed_abs, tag = 'smem constant byte address 0x4 - core index']
  #allocation1 [shape = 'u32[144,128]{1,0:T(1,128)}', space=vmem, size = 0x12000, scoped, tag = 'internal scratch']
  %s0 = inlined_call_operand.hbm [shape: f32[1,512], index: 0, kind: input, shape index: {}]
  %s1 = inlined_call_operand.hbm [shape: f32[1,512], index: 1, kind: output, shape index: {}]
  %s2 = sld [smem:[#allocation0]]
  $region18: #{tpu_custom_call.1} parent=0
    _
  %s4 = ssub.s32 1, %s2
  %s5 = scalar_select 0, %s4, %s2
  $region1: #{tpu_custom_call.1} parent=0
    #allocation2 [shape = 'u8[2048]{0}', space=vmem, size = 0x800, scoped, tag = 'input window, operand 0, single buffered']
    #allocation3 [shape = 's32[1]{0}', space=sflag, size = 0x4, scoped, tag = 'scoped memory for tpu_custom_call.1']
    #allocation4 [shape = 's32[1]{0}', space=sflag, size = 0x4, scoped, tag = 'scoped memory for tpu_custom_call.1']
    #allocation5 [shape = 'u8[2048]{0}', space=vmem, size = 0x800, scoped, tag = 'output window, operand 0, single buffered']
    %6 = vsyncpa [#allocation3], 0
    %7 = vsyncpa [#allocation4], 0
    // Predicated region
    $region2: #{tpu_custom_call.1} parent=1 // pred_check
      _
    $region3: #{tpu_custom_call.1} parent=1 // pred_check_branch
      %9 = sbr.rel (0) target = $region5
    $region4: #{tpu_custom_call.1} parent=1 // pred_region
      %s11 = ssub.s32 64, 64
      %12 = vsyncadd [#allocation3], %s11
      %s14 = sshll.u32 [#allocation2], 4
      %s15 = int_to_ptr.vmem [resolvable:$true] %s14
      %17 = dma.hbm_to_vmem [thread:$0]  %s0, 64, %s15, [#allocation3]
    $region5: #{tpu_custom_call.1} parent=1 // pred_fallthru
      _
    // Predicated region
    $region6: #{tpu_custom_call.1} parent=1 // pred_check
      _
    $region7: #{tpu_custom_call.1} parent=1 // pred_check_branch
      %19 = sbr.rel (0) target = $region9
    $region8: #{tpu_custom_call.1} parent=1 // pred_region
      %20 = dma.done [#allocation3], 64
    $region9: #{tpu_custom_call.1} parent=1 // pred_fallthru
      _
    %v21 = vld [vmem:[#allocation2] sm:$0xf]
    %v22 = vlaneseq
    %vm23 = vcmp.ge.s32.totalorder %v22, 0
    %vm24 = vcmp.lt.s32.totalorder %v22, 512
    %vm25 = vmand %vm23, %vm24
    %26 = vst.msk [vmem:[#allocation5] sm:$0xf] %vm25, %v21
    // Predicated region
    $region10: #{tpu_custom_call.1} parent=1 // pred_check
      _
    $region11: #{tpu_custom_call.1} parent=1 // pred_check_branch
      %28 = sbr.rel (0) target = $region13
    $region12: #{tpu_custom_call.1} parent=1 // pred_region
      %s30 = ssub.s32 64, 64
      %31 = vsyncadd [#allocation4], %s30
      %s33 = sshll.u32 [#allocation5], 4
      %s34 = int_to_ptr.vmem [resolvable:$true] %s33
      %36 = dma.vmem_to_hbm [thread:$0]  %s34, 64, %s1, [#allocation4]
    $region13: #{tpu_custom_call.1} parent=1 // pred_fallthru
      _
    // Predicated region
    $region14: #{tpu_custom_call.1} parent=1 // pred_check
      _
    $region15: #{tpu_custom_call.1} parent=1 // pred_check_branch
      %38 = sbr.rel (0) target = $region17
    $region16: #{tpu_custom_call.1} parent=1 // pred_region
      %39 = dma.done [#allocation4], 64
    $region17: #{tpu_custom_call.1} parent=1 // pred_fallthru
      _
    %40 = vsyncpa [#allocation3], 1
    %41 = vsyncpa [#allocation4], 1

</llo_original>
